<compile_context>
chip_gen: v7x
topology: tpu7x:2x2x1
jax: 0.10.0
libtpu: 0.0.40
codegen_flags: <defaults>
</compile_context>

<pallas_src>
import jax
import jax.numpy as jnp
from jax.experimental import pallas as pl
from jax.experimental.pallas import tpu as pltpu


def coeff_reg_loss(coeffs_dict, w_id, w_exp, w_tex):
    """JAX/Pallas equivalent of CoeffRegLoss.forward.

    coeffs_dict: dict with keys 'id', 'exp', 'tex' (extra keys like 'angle',
    'gamma', 'trans' are ignored, as in the PyTorch module).
    Returns a scalar float32:
        (w_id*sum(id^2) + w_exp*sum(exp^2) + w_tex*sum(tex^2)) / id.shape[0]
    """
    id_c = coeffs_dict["id"]
    exp_c = coeffs_dict["exp"]
    tex_c = coeffs_dict["tex"]

    batch = id_c.shape[0]
    # PyTorch module normalizes by id's batch; assert the assumption that all
    # coeff tensors share the batch dim so the semantics stay well-defined.
    assert exp_c.shape[0] == batch and tex_c.shape[0] == batch, (
        "coeff tensors must share the batch dimension"
    )

    # Lane-pad every coeff dim up to a common multiple of 128, and sublane-pad
    # the batch dim up to a multiple of 8 (zero pads don't affect sum(x^2)).
    max_d = max(id_c.shape[1], exp_c.shape[1], tex_c.shape[1])
    lanes = max(128, ((max_d + 127) // 128) * 128)
    rows = max(8, ((batch + 7) // 8) * 8)

    def _pad(x):
        x = x.astype(jnp.float32)
        b, d = x.shape
        return jnp.pad(x, ((0, rows - b), (0, lanes - d)))

    # Single packed slab: (3, rows, lanes); one DMA into VMEM.
    slab = jnp.stack([_pad(id_c), _pad(exp_c), _pad(tex_c)], axis=0)

    # Static weights with 1/batch folded in -> baked as scalar literals.
    w0 = float(w_id) / batch
    w1 = float(w_exp) / batch
    w2 = float(w_tex) / batch

    def _kernel(x_ref, out_ref):
        # x_ref: VMEM (3, rows, lanes) f32 slab; out_ref: SMEM (1,) f32.
        x = x_ref[...]
        sq = x * x
        s_id = jnp.sum(sq[0])   # full 2D reduce (rows, lanes) -> scalar
        s_exp = jnp.sum(sq[1])
        s_tex = jnp.sum(sq[2])
        # Scalar Python-float weights are inlined as literals (no captured arrays).
        out_ref[0] = w0 * s_id + w1 * s_exp + w2 * s_tex

    total_elems = 3 * rows * lanes
    out = pl.pallas_call(
        _kernel,
        out_shape=jax.ShapeDtypeStruct((1,), jnp.float32),
        in_specs=[pl.BlockSpec(memory_space=pltpu.MemorySpace.VMEM)],
        out_specs=pl.BlockSpec(memory_space=pltpu.MemorySpace.SMEM),
        cost_estimate=pl.CostEstimate(
            flops=2 * total_elems + 6,
            transcendentals=0,
            bytes_accessed=total_elems * 4 + 4,
        ),
    )(slab)
    return out[0]


if __name__ == "__main__":
    # Deterministic "module init": typical 3DMM regularization weights.
    w_id, w_exp, w_tex = 1.0, 0.8, 1.7e-2

    key = jax.random.PRNGKey(0)
    k_id, k_exp, k_tex = jax.random.split(key, 3)
    B = 2
    coeffs = {
        "id": jax.random.normal(k_id, (B, 80), dtype=jnp.float32),
        "exp": jax.random.normal(k_exp, (B, 64), dtype=jnp.float32),
        "tex": jax.random.normal(k_tex, (B, 80), dtype=jnp.float32),
    }

    loss = coeff_reg_loss(coeffs, w_id, w_exp, w_tex)
    loss = jax.block_until_ready(loss)

    # Reference check (plain JAX)
    ref = (
        w_id * jnp.sum(coeffs["id"] ** 2)
        + w_exp * jnp.sum(coeffs["exp"] ** 2)
        + w_tex * jnp.sum(coeffs["tex"] ** 2)
    ) / B
    assert jnp.allclose(loss, ref, rtol=1e-5, atol=1e-5), (loss, ref)

    print("KERNEL_OK")
</pallas_src>

<mosaic_0001>
module attributes {stable_mosaic.version = 11 : i64} {
  func.func @_kernel(%arg0: memref<3x8x128xf32, #tpu.memory_space<vmem>>, %arg1: memref<1xf32, #tpu.memory_space<smem>>) attributes {dimension_semantics = [], scalar_prefetch = 0 : i64, scratch_operands = 0 : i64, tpu.core_type = #tpu.core_type<tc>} {
    %c0 = arith.constant 0 : index
    %c0_0 = arith.constant 0 : index
    %c0_1 = arith.constant 0 : index
    %0 = vector.load %arg0[%c0, %c0_0, %c0_1] : memref<3x8x128xf32, #tpu.memory_space<vmem>>, vector<3x8x128xf32>
    %1 = arith.mulf %0, %0 : vector<3x8x128xf32>
    %2 = vector.extract_strided_slice %1 {offsets = [0, 0, 0], sizes = [1, 8, 128], strides = [1, 1, 1]} : vector<3x8x128xf32> to vector<1x8x128xf32>
    %3 = vector.shape_cast %2 : vector<1x8x128xf32> to vector<8x128xf32>
    %4 = vector.shape_cast %3 : vector<8x128xf32> to vector<1x8x128xf32>
    %cst = arith.constant dense<0.000000e+00> : vector<1xf32>
    %5 = vector.multi_reduction <add>, %4, %cst [1, 2] : vector<1x8x128xf32> to vector<1xf32>
    %6 = vector.shape_cast %5 : vector<1xf32> to vector<1x1x1xf32>
    %7 = vector.extract %6[0, 0, 0] : f32 from vector<1x1x1xf32>
    %8 = vector.extract_strided_slice %1 {offsets = [1, 0, 0], sizes = [1, 8, 128], strides = [1, 1, 1]} : vector<3x8x128xf32> to vector<1x8x128xf32>
    %9 = vector.shape_cast %8 : vector<1x8x128xf32> to vector<8x128xf32>
    %10 = vector.shape_cast %9 : vector<8x128xf32> to vector<1x8x128xf32>
    %cst_2 = arith.constant dense<0.000000e+00> : vector<1xf32>
    %11 = vector.multi_reduction <add>, %10, %cst_2 [1, 2] : vector<1x8x128xf32> to vector<1xf32>
    %12 = vector.shape_cast %11 : vector<1xf32> to vector<1x1x1xf32>
    %13 = vector.extract %12[0, 0, 0] : f32 from vector<1x1x1xf32>
    %14 = vector.extract_strided_slice %1 {offsets = [2, 0, 0], sizes = [1, 8, 128], strides = [1, 1, 1]} : vector<3x8x128xf32> to vector<1x8x128xf32>
    %15 = vector.shape_cast %14 : vector<1x8x128xf32> to vector<8x128xf32>
    %16 = vector.shape_cast %15 : vector<8x128xf32> to vector<1x8x128xf32>
    %cst_3 = arith.constant dense<0.000000e+00> : vector<1xf32>
    %17 = vector.multi_reduction <add>, %16, %cst_3 [1, 2] : vector<1x8x128xf32> to vector<1xf32>
    %18 = vector.shape_cast %17 : vector<1xf32> to vector<1x1x1xf32>
    %19 = vector.extract %18[0, 0, 0] : f32 from vector<1x1x1xf32>
    %cst_4 = arith.constant 5.000000e-01 : f32
    %20 = arith.mulf %cst_4, %7 : f32
    %cst_5 = arith.constant 4.000000e-01 : f32
    %21 = arith.mulf %cst_5, %13 : f32
    %22 = arith.addf %20, %21 : f32
    %cst_6 = arith.constant 8.500000e-03 : f32
    %23 = arith.mulf %cst_6, %19 : f32
    %24 = arith.addf %22, %23 : f32
    %c0_7 = arith.constant 0 : index
    %25 = memref.load %arg1[%c0_7] : memref<1xf32, #tpu.memory_space<smem>>
    memref.store %24, %arg1[%c0_7] : memref<1xf32, #tpu.memory_space<smem>>
    return
  }
}

</mosaic_0001>

<llo_original>
// kernel: tpu_custom_call.1
$region0: #{tpu_custom_call.1}
  #allocation0 [shape = 'u32[]', space=smem, size = 0x4, offset = 0x4, fixed_abs, tag = 'smem constant byte address 0x4 - core index']
  #allocation1 [shape = 'u32[144,128]{1,0:T(1,128)}', space=vmem, size = 0x12000, scoped, tag = 'internal scratch']
  %s0 = inlined_call_operand.hbm [shape: f32[3,8,128], index: 0, kind: input, shape index: {}]
  %s1 = inlined_call_operand.hbm [shape: f32[1], index: 1, kind: output, shape index: {}]
  %s2 = sld [smem:[#allocation0]]
  $region18: #{tpu_custom_call.1} parent=0
    _
  %s4 = ssub.s32 1, %s2
  %s5 = scalar_select 0, %s4, %s2
  $region1: #{tpu_custom_call.1} parent=0
    #allocation2 [shape = 'u8[12288]{0}', space=vmem, size = 0x3000, scoped, tag = 'input window, operand 0, single buffered']
    #allocation3 [shape = 's32[1]{0}', space=sflag, size = 0x4, scoped, tag = 'scoped memory for tpu_custom_call.1']
    #allocation4 [shape = 's32[1]{0}', space=sflag, size = 0x4, scoped, tag = 'scoped memory for tpu_custom_call.1']
    #allocation5 [shape = 'u8[512]{0}', space=smem, size = 0x200, scoped, tag = 'output window, operand 0, single buffered']
    %6 = vsyncpa [#allocation3], 0
    %7 = vsyncpa [#allocation4], 0
    // Predicated region
    $region2: #{tpu_custom_call.1} parent=1 // pred_check
      _
    $region3: #{tpu_custom_call.1} parent=1 // pred_check_branch
      %9 = sbr.rel (0) target = $region5
    $region4: #{tpu_custom_call.1} parent=1 // pred_region
      %s11 = ssub.s32 384, 384
      %12 = vsyncadd [#allocation3], %s11
      %s13 = sshll.u32 [#allocation2], 4
      %s14 = int_to_ptr.vmem [resolvable:$true] %s13
      %19 = dma.hbm_to_vmem [thread:$0]  %s0, 384, %s14, [#allocation3], 128, 128, 8
    $region5: #{tpu_custom_call.1} parent=1 // pred_fallthru
      _
    // Predicated region
    $region6: #{tpu_custom_call.1} parent=1 // pred_check
      _
    $region7: #{tpu_custom_call.1} parent=1 // pred_check_branch
      %21 = sbr.rel (0) target = $region9
    $region8: #{tpu_custom_call.1} parent=1 // pred_region
      %22 = dma.done [#allocation3], 384
    $region9: #{tpu_custom_call.1} parent=1 // pred_fallthru
      _
    %v23 = vld [vmem:[#allocation2] sm:$0xff]
    %v24 = vld [vmem:[#allocation2 + $0x8] sm:$0xff]
    %v25 = vld [vmem:[#allocation2 + $0x10] sm:$0xff]
    %v26 = vmul.f32 %v23, %v23
    %v27 = vmul.f32 %v24, %v24
    %v28 = vmul.f32 %v25, %v25
    %29 = vadd.xlane.f32.xlu0 %v26
    %v30 = vpop.xlane.xlu0 %29
    %v31 = vrot.slane %v30, 4
    %v32 = vadd.f32 %v30, %v31
    %v33 = vrot.slane %v32, 2
    %v34 = vadd.f32 %v32, %v33
    %v35 = vrot.slane %v34, 1
    %v36 = vadd.f32 %v34, %v35
    %s37 = vtos %v36
    %38 = vadd.xlane.f32.xlu0 %v27
    %v39 = vpop.xlane.xlu0 %38
    %v40 = vrot.slane %v39, 4
    %v41 = vadd.f32 %v39, %v40
    %v42 = vrot.slane %v41, 2
    %v43 = vadd.f32 %v41, %v42
    %v44 = vrot.slane %v43, 1
    %v45 = vadd.f32 %v43, %v44
    %s46 = vtos %v45
    %47 = vadd.xlane.f32.xlu0 %v28
    %v48 = vpop.xlane.xlu0 %47
    %v49 = vrot.slane %v48, 4
    %v50 = vadd.f32 %v48, %v49
    %v51 = vrot.slane %v50, 2
    %v52 = vadd.f32 %v50, %v51
    %v53 = vrot.slane %v52, 1
    %v54 = vadd.f32 %v52, %v53
    %s55 = vtos %v54
    %s56 = smul.f32 %s37, 0.5
    %s57 = smul.f32 %s46, 0.4
    %s58 = sadd.f32 %s56, %s57
    %s59 = smul.f32 %s55, 0.0085
    %s60 = sadd.f32 %s58, %s59
    %s61 = scalar_lea.smem [#allocation5], 0
    %62 = sst [smem:[%s61]] %s60
    // Predicated region
    $region10: #{tpu_custom_call.1} parent=1 // pred_check
      _
    $region11: #{tpu_custom_call.1} parent=1 // pred_check_branch
      %64 = sbr.rel (0) target = $region13
    $region12: #{tpu_custom_call.1} parent=1 // pred_region
      %s66 = ssub.s32 16, 16
      %67 = vsyncadd [#allocation4], %s66
      %70 = dma.smem_to_hbm [#allocation5], 16, %s1, [#allocation4]
    $region13: #{tpu_custom_call.1} parent=1 // pred_fallthru
      _
    // Predicated region
    $region14: #{tpu_custom_call.1} parent=1 // pred_check
      _
    $region15: #{tpu_custom_call.1} parent=1 // pred_check_branch
      %72 = sbr.rel (0) target = $region17
    $region16: #{tpu_custom_call.1} parent=1 // pred_region
      %73 = dma.done [#allocation4], 16
    $region17: #{tpu_custom_call.1} parent=1 // pred_fallthru
      _
    %74 = sfence
    %75 = vsyncpa [#allocation3], 1
    %76 = vsyncpa [#allocation4], 1

</llo_original>
